<compile_context>
chip_gen: v7x
topology: tpu7x:2x2x1
jax: 0.10.0
libtpu: 0.0.40
codegen_flags: <defaults>
</compile_context>

<pallas_src>
import functools

import jax
import jax.numpy as jnp
from jax.experimental import pallas as pl
from jax.experimental.pallas import tpu as pltpu


def _channel_attention_kernel(x_ref, w1t_ref, w2t_ref, o_ref,
                              sum_acc, max_acc, *,
                              inv_hw, hw_total, block_hw, lane_width,
                              needs_mask):
    # x_ref   : (bn, C, block_hw) spatial tile of the input (native dtype)
    # w1t_ref : (C, hidden)  fc1 weight^T, VMEM-resident across the grid
    # w2t_ref : (hidden, C)  fc2 weight^T, VMEM-resident across the grid
    # o_ref   : (bn, 1, C)   sigmoid(fc2(relu(fc1(avg))) + fc2(relu(fc1(max))))
    # sum_acc / max_acc : (bn, C, lane_width) f32 lane-partial accumulators
    k = pl.program_id(1)
    last = pl.num_programs(1) - 1
    bn = sum_acc.shape[0]
    num_full = block_hw // lane_width
    rem = block_hw - num_full * lane_width

    @pl.when(k == 0)
    def _init():
        sum_acc[...] = jnp.zeros_like(sum_acc)
        max_acc[...] = jnp.full_like(max_acc, -jnp.inf)

    def _one_chunk(start, width, masked):
        # Pure-VPU accumulate into the lane-partials; the expensive cross-lane
        # (XLU) reduce is deferred to the finalize step.
        chunk = x_ref[:, :, pl.ds(start, width)].astype(jnp.float32)
        if masked:
            lane_ids = jax.lax.broadcasted_iota(jnp.int32, chunk.shape, 2)
            pos = k * block_hw + start + lane_ids
            valid = pos < hw_total
            s_chunk = jnp.where(valid, chunk, 0.0)
            m_chunk = jnp.where(valid, chunk, -jnp.inf)
        else:
            s_chunk = chunk
            m_chunk = chunk
        sum_acc[:, :, :width] += s_chunk
        max_acc[:, :, :width] = jnp.maximum(max_acc[:, :, :width], m_chunk)

    def _accumulate(masked):
        if num_full <= 8:
            for j in range(num_full):
                _one_chunk(j * lane_width, lane_width, masked)
        else:
            def body(j, carry):
                start = pl.multiple_of(j * lane_width, lane_width)
                _one_chunk(start, lane_width, masked)
                return carry
            jax.lax.fori_loop(0, num_full, body, 0)
        if rem:  # only when a single full-extent block has HW % 128 != 0
            _one_chunk(num_full * lane_width, rem, masked)

    if needs_mask:
        # Only the last spatial tile can run past H*W: keep the steady-state
        # loop mask-free and pay the selects only on the tail tile.
        @pl.when(k != last)
        def _full_tiles():
            _accumulate(False)

        @pl.when(k == last)
        def _tail_tile():
            _accumulate(True)
    else:
        _accumulate(False)

    @pl.when(k == last)
    def _finalize():
        # Single cross-lane reduce per output tile.
        sums = jnp.sum(sum_acc[...], axis=-1)          # (bn, C) f32
        maxs = jnp.max(max_acc[...], axis=-1)          # (bn, C) f32
        avg = sums * inv_hw                            # mean: scale once here
        pooled = jnp.concatenate([avg, maxs], axis=0)  # (2*bn, C)

        w_dtype = w1t_ref.dtype
        if w_dtype != jnp.float32:
            pooled = pooled.astype(w_dtype)            # native bf16 MXU path
        h = jnp.maximum(
            jnp.dot(pooled, w1t_ref[...], preferred_element_type=jnp.float32),
            0.0)
        if w_dtype != jnp.float32:
            h = h.astype(w_dtype)
        y = jnp.dot(h, w2t_ref[...], preferred_element_type=jnp.float32)
        out = y[:bn] + y[bn:]                          # avg branch + max branch
        o_ref[:, 0, :] = jax.nn.sigmoid(out).astype(o_ref.dtype)


def _largest_divisor_leq(n, cap):
    cap = max(1, min(cap, n))
    for d in range(cap, 0, -1):
        if n % d == 0:
            return d
    return 1


def _pick_tiles(n, c, hw, itemsize, budget_bytes):
    """Choose (block_n, block_hw, lane_width, needs_mask)."""
    # Batch tile: <= 8 rows, prefer >= 2 batch tiles so the 'parallel' axis can
    # be sharded across both TensorCores of a dual-TC chip (v7x).
    block_n = _largest_divisor_leq(n, min(8, n // 2)) if n > 1 else 1

    lane_width = min(128, hw)
    if hw <= 128:
        return block_n, hw, lane_width, False

    hw_ceil = -(-hw // 128) * 128
    # Keep each strided-DMA row >= ~2 KiB contiguous (512 f32 / 1024 bf16
    # lanes); shrink the batch tile before shrinking the row length.
    min_lanes = min(hw_ceil,
                    max(128, ((-(-2048 // itemsize)) + 127) // 128 * 128))

    def lanes_for(bn):
        max_lanes = budget_bytes // max(1, bn * c * itemsize)
        return min(hw_ceil, max(128, (max_lanes // 128) * 128))

    block_hw = lanes_for(block_n)
    while block_hw < min_lanes and block_n > 1:
        block_n = _largest_divisor_leq(n, max(1, block_n // 2))
        block_hw = lanes_for(block_n)

    if block_hw >= hw:
        # Whole spatial extent fits in one block: use the exact extent (full
        # array dim is always a legal last block dim); no tail masking needed.
        return block_n, hw, lane_width, False
    return block_n, block_hw, lane_width, (hw % block_hw) != 0


def _vmem_budget():
    """Per-generation scoped-VMEM limit and x-tile budget.

    v5e/v6e (128 MiB physical): 64 MiB scoped limit, ~21 MiB x-tiles.
    v7x     ( 64 MiB physical): 48 MiB scoped limit,  16 MiB x-tiles.
    """
    cap = 64 * 1024 * 1024
    try:
        info = pltpu.get_tpu_info()
        cap = int(getattr(info, "vmem_capacity_bytes", cap) or cap)
    except Exception:
        pass
    vmem_limit = min(64 * 1024 * 1024, max(32 * 1024 * 1024, (cap * 3) // 4))
    tile_budget = max(4 * 1024 * 1024, vmem_limit // 3)
    return vmem_limit, tile_budget


def channel_attention(x, w1, w2, *, tile_budget_bytes=None,
                      vmem_limit_bytes=None):
    """x: (N, C, H, W) NCHW.  w1: (C//16, C) fc1 weight.  w2: (C, C//16) fc2 weight.

    Returns (N, C, 1, 1) attention map, matching the PyTorch module output.
    """
    N, C, H, W = x.shape
    hidden = w1.shape[0]
    HW = H * W

    default_limit, default_budget = _vmem_budget()
    vmem_limit = vmem_limit_bytes or default_limit
    budget = tile_budget_bytes or default_budget

    x_flat = x.reshape(N, C, HW)
    w1t = jnp.transpose(w1)   # (C, hidden)
    w2t = jnp.transpose(w2)   # (hidden, C)

    itemsize = x.dtype.itemsize
    block_n, block_hw, lane_width, needs_mask = _pick_tiles(
        N, C, HW, itemsize, budget)
    grid = (N // block_n, pl.cdiv(HW, block_hw))

    cost = pl.CostEstimate(
        flops=2 * N * C * HW + 8 * N * C * hidden,
        transcendentals=N * C,
        bytes_accessed=(x_flat.size * itemsize
                        + w1.size * w1.dtype.itemsize
                        + w2.size * w2.dtype.itemsize
                        + N * C * itemsize),
    )

    kernel = functools.partial(
        _channel_attention_kernel,
        inv_hw=1.0 / float(HW), hw_total=HW, block_hw=block_hw,
        lane_width=lane_width, needs_mask=needs_mask)

    out = pl.pallas_call(
        kernel,
        out_shape=jax.ShapeDtypeStruct((N, 1, C), x.dtype),
        grid_spec=pltpu.PrefetchScalarGridSpec(
            num_scalar_prefetch=0,
            grid=grid,
            in_specs=[
                # x: stream spatial tiles; batch tiles on the parallel axis.
                # (If a v7x trace shows exposed DMA at the epilogue step,
                #  sweep pipeline_mode=pl.Buffered(3) here.)
                pl.BlockSpec((block_n, C, block_hw), lambda i, k: (i, 0, k)),
                # weights: constant index maps -> stay VMEM-resident.
                pl.BlockSpec((C, hidden), lambda i, k: (0, 0)),
                pl.BlockSpec((hidden, C), lambda i, k: (0, 0)),
            ],
            out_specs=pl.BlockSpec((block_n, 1, C), lambda i, k: (i, 0, 0)),
            scratch_shapes=[
                pltpu.VMEM((block_n, C, lane_width), jnp.float32),  # sum partials
                pltpu.VMEM((block_n, C, lane_width), jnp.float32),  # max partials
            ],
        ),
        compiler_params=pltpu.CompilerParams(
            dimension_semantics=("parallel", "arbitrary"),
            vmem_limit_bytes=vmem_limit,
        ),
        cost_estimate=cost,
    )(x_flat, w1t, w2t)

    return out.reshape(N, C, 1, 1)


def _reference(x, w1, w2):
    # Pure-JAX reference of the PyTorch forward.
    avg = jnp.mean(x, axis=(2, 3))                        # (N, C)
    mx = jnp.max(x, axis=(2, 3))                          # (N, C)

    def branch(v):
        h = jnp.maximum(v @ w1.T, 0.0)                    # (N, hidden)
        return h @ w2.T                                   # (N, C)

    out = jax.nn.sigmoid(branch(avg) + branch(mx))
    return out.reshape(x.shape[0], x.shape[1], 1, 1)


if __name__ == "__main__":
    # in_planes must be >= 16 so that in_planes // 16 >= 1 (PyTorch ratio=16).
    # H*W = 324 is deliberately NOT a multiple of 128 to exercise the
    # remainder-handling paths.
    N, C, H, W = 2, 64, 18, 18
    hidden = C // 16

    key = jax.random.PRNGKey(0)
    kx, k1, k2 = jax.random.split(key, 3)
    x = jax.random.normal(kx, (N, C, H, W), dtype=jnp.float32)
    # Deterministic synthetic weights (shapes from nn.Conv2d(C, C//16, 1) etc.).
    w1 = jax.random.normal(k1, (hidden, C), dtype=jnp.float32) * 0.1   # fc1 weight
    w2 = jax.random.normal(k2, (C, hidden), dtype=jnp.float32) * 0.1   # fc2 weight

    ref = _reference(x, w1, w2)

    # 1) Default budgets: single full-extent spatial block (no masking),
    #    exercises the in-tile remainder chunk (324 = 2*128 + 68).
    out = channel_attention(x, w1, w2)
    jax.block_until_ready(out)
    assert out.shape == (N, C, 1, 1)
    assert jnp.allclose(out, ref, atol=1e-5, rtol=1e-5)

    # 2) Tiny tile budget: forces multi-tile spatial streaming with a masked
    #    tail tile (exercises the accumulator + remainder-tiling path).
    out_small = channel_attention(x, w1, w2, tile_budget_bytes=64 * 1024)
    jax.block_until_ready(out_small)
    assert jnp.allclose(out_small, ref, atol=1e-5, rtol=1e-5)

    print("KERNEL_OK")
</pallas_src>

<mosaic_0001>
module attributes {stable_mosaic.version = 11 : i64} {
  func.func @_channel_attention_kernel(%arg0: i32, %arg1: i32, %arg2: memref<1x64x324xf32, #tpu.memory_space<vmem>>, %arg3: memref<64x4xf32, #tpu.memory_space<vmem>>, %arg4: memref<4x64xf32, #tpu.memory_space<vmem>>, %arg5: memref<1x1x64xf32, #tpu.memory_space<vmem>>, %arg6: memref<1x64x128xf32, #tpu.memory_space<vmem>>, %arg7: memref<1x64x128xf32, #tpu.memory_space<vmem>>) attributes {dimension_semantics = [#tpu.dimension_semantics<parallel>, #tpu.dimension_semantics<arbitrary>], iteration_bounds = array<i64: 2, 1>, scalar_prefetch = 0 : i64, scratch_operands = 2 : i64, tpu.core_type = #tpu.core_type<tc>, window_params = [{transform_indices = @transform_0, window_bounds = array<i64: 1, 64, 324>}, {pipeline_mode = #tpu.pipeline_mode<synchronous>, transform_indices = @transform_1, window_bounds = array<i64: 64, 4>}, {pipeline_mode = #tpu.pipeline_mode<synchronous>, transform_indices = @transform_2, window_bounds = array<i64: 4, 64>}, {transform_indices = @transform_3, window_bounds = array<i64: 1, 1, 64>}]} {
    %c0_i32 = arith.constant 0 : i32
    %0 = arith.cmpi eq, %arg1, %c0_i32 : i32
    %1 = arith.extui %0 : i1 to i32
    %c0_i32_0 = arith.constant 0 : i32
    %2 = arith.cmpi ne, %1, %c0_i32_0 : i32
    scf.if %2 {
      %cst = arith.constant 0.000000e+00 : f32
      %27 = vector.broadcast %cst : f32 to vector<1x64x128xf32>
      %c0_45 = arith.constant 0 : index
      %c0_46 = arith.constant 0 : index
      %c0_47 = arith.constant 0 : index
      %28 = vector.load %arg6[%c0_45, %c0_46, %c0_47] : memref<1x64x128xf32, #tpu.memory_space<vmem>>, vector<1x64x128xf32>
      tpu.vector_store %arg6[%c0_45, %c0_46, %c0_47], %27 {strides = array<i32>} : memref<1x64x128xf32, #tpu.memory_space<vmem>>, vector<1x64x128xf32>,
      %cst_48 = arith.constant 0xFF800000 : f32
      %29 = vector.broadcast %cst_48 : f32 to vector<1x64x128xf32>
      %c0_49 = arith.constant 0 : index
      %c0_50 = arith.constant 0 : index
      %c0_51 = arith.constant 0 : index
      %30 = vector.load %arg7[%c0_49, %c0_50, %c0_51] : memref<1x64x128xf32, #tpu.memory_space<vmem>>, vector<1x64x128xf32>
      tpu.vector_store %arg7[%c0_49, %c0_50, %c0_51], %29 {strides = array<i32>} : memref<1x64x128xf32, #tpu.memory_space<vmem>>, vector<1x64x128xf32>,
    } else {
    }
    %c0 = arith.constant 0 : index
    %c0_1 = arith.constant 0 : index
    %c0_2 = arith.constant 0 : index
    %3 = vector.load %arg2[%c0, %c0_1, %c0_2] : memref<1x64x324xf32, #tpu.memory_space<vmem>>, vector<1x64x128xf32>
    %c0_3 = arith.constant 0 : index
    %c0_4 = arith.constant 0 : index
    %c0_5 = arith.constant 0 : index
    %4 = vector.load %arg6[%c0_3, %c0_4, %c0_5] : memref<1x64x128xf32, #tpu.memory_space<vmem>>, vector<1x64x128xf32>
    %5 = arith.addf %4, %3 : vector<1x64x128xf32>
    %c0_6 = arith.constant 0 : index
    %c0_7 = arith.constant 0 : index
    %c0_8 = arith.constant 0 : index
    %6 = vector.load %arg6[%c0_6, %c0_7, %c0_8] : memref<1x64x128xf32, #tpu.memory_space<vmem>>, vector<1x64x128xf32>
    tpu.vector_store %arg6[%c0_6, %c0_7, %c0_8], %5 {strides = array<i32>} : memref<1x64x128xf32, #tpu.memory_space<vmem>>, vector<1x64x128xf32>,
    %c0_9 = arith.constant 0 : index
    %c0_10 = arith.constant 0 : index
    %c0_11 = arith.constant 0 : index
    %7 = vector.load %arg7[%c0_9, %c0_10, %c0_11] : memref<1x64x128xf32, #tpu.memory_space<vmem>>, vector<1x64x128xf32>
    %8 = arith.maximumf %7, %3 : vector<1x64x128xf32>
    %c0_12 = arith.constant 0 : index
    %c0_13 = arith.constant 0 : index
    %c0_14 = arith.constant 0 : index
    %9 = vector.load %arg7[%c0_12, %c0_13, %c0_14] : memref<1x64x128xf32, #tpu.memory_space<vmem>>, vector<1x64x128xf32>
    tpu.vector_store %arg7[%c0_12, %c0_13, %c0_14], %8 {strides = array<i32>} : memref<1x64x128xf32, #tpu.memory_space<vmem>>, vector<1x64x128xf32>,
    %c0_15 = arith.constant 0 : index
    %c0_16 = arith.constant 0 : index
    %c128 = arith.constant 128 : index
    %10 = vector.load %arg2[%c0_15, %c0_16, %c128] : memref<1x64x324xf32, #tpu.memory_space<vmem>>, vector<1x64x128xf32>
    %c0_17 = arith.constant 0 : index
    %c0_18 = arith.constant 0 : index
    %c0_19 = arith.constant 0 : index
    %11 = vector.load %arg6[%c0_17, %c0_18, %c0_19] : memref<1x64x128xf32, #tpu.memory_space<vmem>>, vector<1x64x128xf32>
    %12 = arith.addf %11, %10 : vector<1x64x128xf32>
    %c0_20 = arith.constant 0 : index
    %c0_21 = arith.constant 0 : index
    %c0_22 = arith.constant 0 : index
    %13 = vector.load %arg6[%c0_20, %c0_21, %c0_22] : memref<1x64x128xf32, #tpu.memory_space<vmem>>, vector<1x64x128xf32>
    tpu.vector_store %arg6[%c0_20, %c0_21, %c0_22], %12 {strides = array<i32>} : memref<1x64x128xf32, #tpu.memory_space<vmem>>, vector<1x64x128xf32>,
    %c0_23 = arith.constant 0 : index
    %c0_24 = arith.constant 0 : index
    %c0_25 = arith.constant 0 : index
    %14 = vector.load %arg7[%c0_23, %c0_24, %c0_25] : memref<1x64x128xf32, #tpu.memory_space<vmem>>, vector<1x64x128xf32>
    %15 = arith.maximumf %14, %10 : vector<1x64x128xf32>
    %c0_26 = arith.constant 0 : index
    %c0_27 = arith.constant 0 : index
    %c0_28 = arith.constant 0 : index
    %16 = vector.load %arg7[%c0_26, %c0_27, %c0_28] : memref<1x64x128xf32, #tpu.memory_space<vmem>>, vector<1x64x128xf32>
    tpu.vector_store %arg7[%c0_26, %c0_27, %c0_28], %15 {strides = array<i32>} : memref<1x64x128xf32, #tpu.memory_space<vmem>>, vector<1x64x128xf32>,
    %c0_29 = arith.constant 0 : index
    %c0_30 = arith.constant 0 : index
    %c256 = arith.constant 256 : index
    %17 = vector.load %arg2[%c0_29, %c0_30, %c256] : memref<1x64x324xf32, #tpu.memory_space<vmem>>, vector<1x64x68xf32>
    %c0_31 = arith.constant 0 : index
    %c0_32 = arith.constant 0 : index
    %c0_33 = arith.constant 0 : index
    %18 = vector.load %arg6[%c0_31, %c0_32, %c0_33] : memref<1x64x128xf32, #tpu.memory_space<vmem>>, vector<1x64x68xf32>
    %19 = arith.addf %18, %17 : vector<1x64x68xf32>
    %c0_34 = arith.constant 0 : index
    %c0_35 = arith.constant 0 : index
    %c0_36 = arith.constant 0 : index
    %20 = vector.load %arg6[%c0_34, %c0_35, %c0_36] : memref<1x64x128xf32, #tpu.memory_space<vmem>>, vector<1x64x68xf32>
    tpu.vector_store %arg6[%c0_34, %c0_35, %c0_36], %19 {strides = array<i32>} : memref<1x64x128xf32, #tpu.memory_space<vmem>>, vector<1x64x68xf32>,
    %c0_37 = arith.constant 0 : index
    %c0_38 = arith.constant 0 : index
    %c0_39 = arith.constant 0 : index
    %21 = vector.load %arg7[%c0_37, %c0_38, %c0_39] : memref<1x64x128xf32, #tpu.memory_space<vmem>>, vector<1x64x68xf32>
    %22 = arith.maximumf %21, %17 : vector<1x64x68xf32>
    %c0_40 = arith.constant 0 : index
    %c0_41 = arith.constant 0 : index
    %c0_42 = arith.constant 0 : index
    %23 = vector.load %arg7[%c0_40, %c0_41, %c0_42] : memref<1x64x128xf32, #tpu.memory_space<vmem>>, vector<1x64x68xf32>
    tpu.vector_store %arg7[%c0_40, %c0_41, %c0_42], %22 {strides = array<i32>} : memref<1x64x128xf32, #tpu.memory_space<vmem>>, vector<1x64x68xf32>,
    %c0_i32_43 = arith.constant 0 : i32
    %24 = arith.cmpi eq, %arg1, %c0_i32_43 : i32
    %25 = arith.extui %24 : i1 to i32
    %c0_i32_44 = arith.constant 0 : i32
    %26 = arith.cmpi ne, %25, %c0_i32_44 : i32
    scf.if %26 {
      %c0_45 = arith.constant 0 : index
      %c0_46 = arith.constant 0 : index
      %c0_47 = arith.constant 0 : index
      %27 = vector.load %arg6[%c0_45, %c0_46, %c0_47] : memref<1x64x128xf32, #tpu.memory_space<vmem>>, vector<1x64x128xf32>
      %cst = arith.constant dense<0.000000e+00> : vector<1x64xf32>
      %28 = vector.multi_reduction <add>, %27, %cst [2] : vector<1x64x128xf32> to vector<1x64xf32>
      %c0_48 = arith.constant 0 : index
      %c0_49 = arith.constant 0 : index
      %c0_50 = arith.constant 0 : index
      %29 = vector.load %arg7[%c0_48, %c0_49, %c0_50] : memref<1x64x128xf32, #tpu.memory_space<vmem>>, vector<1x64x128xf32>
      %cst_51 = arith.constant dense<0xFF800000> : vector<1x64xf32>
      %30 = vector.multi_reduction <maximumf>, %29, %cst_51 [2] : vector<1x64x128xf32> to vector<1x64xf32>
      %cst_52 = arith.constant 0.00308641978 : f32
      %31 = vector.broadcast %cst_52 : f32 to vector<1x64xf32>
      %32 = arith.mulf %28, %31 : vector<1x64xf32>
      %33 = tpu.concatenate %32, %30 in 0 : vector<1x64xf32>, vector<1x64xf32> -> vector<2x64xf32>
      %c0_53 = arith.constant 0 : index
      %c0_54 = arith.constant 0 : index
      %34 = vector.load %arg3[%c0_53, %c0_54] : memref<64x4xf32, #tpu.memory_space<vmem>>, vector<64x4xf32>
      %cst_55 = arith.constant dense<0.000000e+00> : vector<2x4xf32>
      %35 = tpu.matmul %33, %34, %cst_55 {dimension_numbers = #tpu.dot_dimension_numbers<[1], [0], [0], [1], [0, 0, 1, 1], [], []>} : vector<2x64xf32>, vector<64x4xf32>, vector<2x4xf32> -> vector<2x4xf32>
      %cst_56 = arith.constant 0.000000e+00 : f32
      %36 = vector.broadcast %cst_56 : f32 to vector<2x4xf32>
      %37 = arith.maximumf %35, %36 : vector<2x4xf32>
      %c0_57 = arith.constant 0 : index
      %c0_58 = arith.constant 0 : index
      %38 = vector.load %arg4[%c0_57, %c0_58] : memref<4x64xf32, #tpu.memory_space<vmem>>, vector<4x64xf32>
      %cst_59 = arith.constant dense<0.000000e+00> : vector<2x64xf32>
      %39 = tpu.matmul %37, %38, %cst_59 {dimension_numbers = #tpu.dot_dimension_numbers<[1], [0], [0], [1], [0, 0, 1, 1], [], []>} : vector<2x4xf32>, vector<4x64xf32>, vector<2x64xf32> -> vector<2x64xf32>
      %40 = vector.extract_strided_slice %39 {offsets = [0, 0], sizes = [1, 64], strides = [1, 1]} : vector<2x64xf32> to vector<1x64xf32>
      %41 = vector.extract_strided_slice %39 {offsets = [1, 0], sizes = [1, 64], strides = [1, 1]} : vector<2x64xf32> to vector<1x64xf32>
      %42 = arith.addf %40, %41 : vector<1x64xf32>
      %43 = arith.negf %42 : vector<1x64xf32>
      %44 = math.exp %43 : vector<1x64xf32>
      %cst_60 = arith.constant 1.000000e+00 : f32
      %45 = vector.broadcast %cst_60 : f32 to vector<1x64xf32>
      %46 = arith.addf %45, %44 : vector<1x64xf32>
      %47 = arith.divf %45, %46 : vector<1x64xf32>
      %c0_61 = arith.constant 0 : index
      %c0_62 = arith.constant 0 : index
      %c0_63 = arith.constant 0 : index
      %48 = vector.load %arg5[%c0_61, %c0_62, %c0_63] : memref<1x1x64xf32, #tpu.memory_space<vmem>>, vector<1x1x64xf32>
      %49 = vector.shape_cast %48 : vector<1x1x64xf32> to vector<1x64xf32>
      %50 = vector.shape_cast %47 : vector<1x64xf32> to vector<1x1x64xf32>
      tpu.vector_store %arg5[%c0_61, %c0_62, %c0_63], %50 {strides = array<i32>} : memref<1x1x64xf32, #tpu.memory_space<vmem>>, vector<1x1x64xf32>,
    } else {
    }
    return
  }
  func.func @transform_0(%arg0: i32, %arg1: i32) -> (i32, i32, i32) {
    %c0_i32 = arith.constant 0 : i32
    %c0_i32_0 = arith.constant 0 : i32
    return %arg0, %c0_i32, %arg1 : i32, i32, i32
  }
  func.func @transform_1(%arg0: i32, %arg1: i32) -> (i32, i32) {
    %c0_i32 = arith.constant 0 : i32
    %c0_i32_0 = arith.constant 0 : i32
    %c0_i32_1 = arith.constant 0 : i32
    return %c0_i32, %c0_i32_0 : i32, i32
  }
  func.func @transform_2(%arg0: i32, %arg1: i32) -> (i32, i32) {
    %c0_i32 = arith.constant 0 : i32
    %c0_i32_0 = arith.constant 0 : i32
    %c0_i32_1 = arith.constant 0 : i32
    return %c0_i32, %c0_i32_0 : i32, i32
  }
  func.func @transform_3(%arg0: i32, %arg1: i32) -> (i32, i32, i32) {
    %c0_i32 = arith.constant 0 : i32
    %c0_i32_0 = arith.constant 0 : i32
    %c0_i32_1 = arith.constant 0 : i32
    return %arg0, %c0_i32, %c0_i32_0 : i32, i32, i32
  }
}

</mosaic_0001>

<llo_original>
// kernel: tpu_custom_call.1
$region0: #{tpu_custom_call.1}
  #allocation0 [shape = 'u32[]', space=smem, size = 0x4, offset = 0x4, fixed_abs, tag = 'smem constant byte address 0x4 - core index']
  #allocation1 [shape = 'u32[144,128]{1,0:T(1,128)}', space=vmem, size = 0x12000, scoped, tag = 'internal scratch']
  #allocation2 [shape = 'f32[1,64,128]{2,1,0:T(8,128)}', space=vmem, size = 0x8000, scoped, tag = 'scratch operand']
  #allocation3 [shape = 'f32[1,64,128]{2,1,0:T(8,128)}', space=vmem, size = 0x8000, scoped, tag = 'scratch operand']
  %s0 = inlined_call_operand.hbm [shape: f32[2,64,324], index: 0, kind: input, shape index: {}]
  %s1 = inlined_call_operand.vmem [shape: f32[64,4], index: 1, kind: input, shape index: {}]
  %s2 = inlined_call_operand.vmem [shape: f32[4,64], index: 2, kind: input, shape index: {}]
  %s3 = inlined_call_operand.hbm [shape: f32[2,1,64], index: 3, kind: output, shape index: {}]
  %s4 = sld [smem:[#allocation0]]
  $region57: #{tpu_custom_call.1} parent=0
    _
  %s6 = ssub.s32 1, %s4
  %s7 = scalar_select 0, %s6, %s4
  $region1: #{tpu_custom_call.1} parent=0
    #allocation4 [shape = 'u8[196608]{0}', space=vmem, size = 0x30000, scoped, tag = 'input window, operand 0']
    #allocation5 [shape = 's32[2]{0}', space=sflag, size = 0x8, scoped, tag = 'scoped memory for tpu_custom_call.1']
    #allocation6 [shape = 's32[2]{0}', space=sflag, size = 0x8, scoped, tag = 'scoped memory for tpu_custom_call.1']
    #allocation7 [shape = 'u8[1024]{0}', space=vmem, size = 0x400, scoped, tag = 'output window, operand 0']
    %8 = vsyncpa [#allocation5], 0
    %s9 = scalar_lea.sflag [#allocation5], 1
    %10 = vsyncpa %s9, 0
    %11 = vsyncpa [#allocation6], 0
    %s12 = scalar_lea.sflag [#allocation6], 1
    %13 = vsyncpa %s12, 0
    loop: start=0, step=1, limit=4
    $region2: #{tpu_custom_call.1} parent=1 // loop_pre_header
      _
    $region3: #{tpu_custom_call.1} parent=1 // loop_header
      %s15 = sphi 0, %s19
      %p16 = scmp.ge.s32.totalorder %s15, 4
      %s22 = sphi 0, %s34
      %s23 = sphi 0, %s30
      %s24 = sphi 0, %s22
      %s25 = sphi 0, %s23
      %s26 = sphi 0, %s24
      %s27 = sphi 0, %s25
      %s39 = sphi 0, %s41
      %s42 = sphi 0, %s39
      %s43 = sphi 0, %s42
      %s59 = sphi 0, %s43
      %s63 = sphi 0, %s63
      %s65 = sphi 0, %s63
      %s66 = sphi 0, %s65
      %s80 = sphi 0, %s66
      %s84 = sphi 0, %s84
      %s86 = sphi 0, %s84
      %s87 = sphi 0, %s86
      %s101 = sphi 0, %s87
      %s107 = sphi 0, %s109
      %s110 = sphi 0, %s107
      %s111 = sphi 0, %s110
      %s127 = sphi 0, %s111
    $region4: #{tpu_custom_call.1} parent=1 // loop_header_branch
      %18 = sbr.rel (%p16) target = $region8
    $region5: #{tpu_custom_call.1} parent=1 // loop_body
      %s20 = ssub.s32 %s15, 1
      %s21 = ssub.s32 %s15, 2
      %s28 = sadd.s32 1, %s23
      %p29 = scmp.ge.s32.totalorder %s28, 1
      %s30 = scalar_select %p29, 0, %s28
      %s31 = sadd.s32 1, %s22
      %s32 = scalar_select %p29, %s31, %s22
      %p33 = scmp.ge.s32.totalorder %s32, 2
      %s34 = scalar_select %p33, 0, %s32
      %s35 = ssub.s32 %s22, %s34
      %s36 = ssub.s32 %s23, %s30
      %s37 = sor.u32 %s35, %s36
      %p38 = scmp.eq.s32.totalorder %s37, 0
      %s40 = sadd.s32 %s39, 1
      %s41 = scalar_select %p38, %s39, %s40
      %p44 = pneg %p38
      %p45 = scmp.eq.s32.totalorder %s15, 1
      %p46 = por %p44, %p45
      %p47 = scmp.ne.s32.totalorder %s39, %s42
      %p48 = scmp.eq.s32.totalorder %s15, 0
      %p49 = por %p47, %p48
      %p50 = scmp.ne.s32.totalorder %s39, %s42
      %p51 = scmp.eq.s32.totalorder %s20, 1
      %p52 = por %p50, %p51
      %p53 = scmp.ne.s32.totalorder %s42, %s43
      %p54 = scmp.eq.s32.totalorder %s20, 0
      %p55 = por %p53, %p54
      %p56 = scmp.ne.s32.totalorder %s42, %s43
      %p57 = scmp.eq.s32.totalorder %s21, 1
      %p58 = por %p56, %p57
      %p60 = scmp.ne.s32.totalorder %s43, %s59
      %p61 = scmp.eq.s32.totalorder %s21, 0
      %p62 = por %p60, %p61
      %s64 = sadd.s32 %s63, 1
      %p67 = scmp.eq.s32.totalorder %s15, 1
      %p68 = scmp.ne.s32.totalorder %s63, %s65
      %p69 = scmp.eq.s32.totalorder %s15, 0
      %p70 = por %p68, %p69
      %p71 = scmp.ne.s32.totalorder %s63, %s65
      %p72 = scmp.eq.s32.totalorder %s20, 1
      %p73 = por %p71, %p72
      %p74 = scmp.ne.s32.totalorder %s65, %s66
      %p75 = scmp.eq.s32.totalorder %s20, 0
      %p76 = por %p74, %p75
      %p77 = scmp.ne.s32.totalorder %s65, %s66
      %p78 = scmp.eq.s32.totalorder %s21, 1
      %p79 = por %p77, %p78
      %p81 = scmp.ne.s32.totalorder %s66, %s80
      %p82 = scmp.eq.s32.totalorder %s21, 0
      %p83 = por %p81, %p82
      %s85 = sadd.s32 %s84, 1
      %p88 = scmp.eq.s32.totalorder %s15, 1
      %p89 = scmp.ne.s32.totalorder %s84, %s86
      %p90 = scmp.eq.s32.totalorder %s15, 0
      %p91 = por %p89, %p90
      %p92 = scmp.ne.s32.totalorder %s84, %s86
      %p93 = scmp.eq.s32.totalorder %s20, 1
      %p94 = por %p92, %p93
      %p95 = scmp.ne.s32.totalorder %s86, %s87
      %p96 = scmp.eq.s32.totalorder %s20, 0
      %p97 = por %p95, %p96
      %p98 = scmp.ne.s32.totalorder %s86, %s87
      %p99 = scmp.eq.s32.totalorder %s21, 1
      %p100 = por %p98, %p99
      %p102 = scmp.ne.s32.totalorder %s87, %s101
      %p103 = scmp.eq.s32.totalorder %s21, 0
      %p104 = por %p102, %p103
      %s105 = ssub.s32 %s22, %s34
      %p106 = scmp.eq.s32.totalorder %s105, 0
      %s108 = sadd.s32 %s107, 1
      %s109 = scalar_select %p106, %s107, %s108
      %p112 = pneg %p106
      %p113 = scmp.eq.s32.totalorder %s15, 1
      %p114 = por %p112, %p113
      %p115 = scmp.ne.s32.totalorder %s107, %s110
      %p116 = scmp.eq.s32.totalorder %s15, 0
      %p117 = por %p115, %p116
      %p118 = scmp.ne.s32.totalorder %s107, %s110
      %p119 = scmp.eq.s32.totalorder %s20, 1
      %p120 = por %p118, %p119
      %p121 = scmp.ne.s32.totalorder %s110, %s111
      %p122 = scmp.eq.s32.totalorder %s20, 0
      %p123 = por %p121, %p122
      %p124 = scmp.ne.s32.totalorder %s110, %s111
      %p125 = scmp.eq.s32.totalorder %s21, 1
      %p126 = por %p124, %p125
      %p128 = scmp.ne.s32.totalorder %s111, %s127
      %p129 = scmp.eq.s32.totalorder %s21, 0
      %p130 = por %p128, %p129
      %p131 = scmp.le.s32.totalorder 1, %s15
      %p132 = scmp.lt.s32.totalorder %s15, 3
      %p133 = pnand %p131, %p132
      %p134 = pneg %p133
      // Predicated region
      $region9: #{tpu_custom_call.1} parent=5 // pred_check
        _
      $region10: #{tpu_custom_call.1} parent=5 // pred_check_branch
        %136 = sbr.rel (%p133) target = $region12
      $region11: #{tpu_custom_call.1} parent=5 // pred_region
        %s137 = ssub.s32 %s15, 1
        // Predicated region
        $region13: #{tpu_custom_call.1} parent=11 // pred_check
          %p138 = pneg %p76
        $region14: #{tpu_custom_call.1} parent=11 // pred_check_branch
          %140 = sbr.rel (%p138) target = $region16
        $region15: #{tpu_custom_call.1} parent=11 // pred_region
          _
        $region16: #{tpu_custom_call.1} parent=11 // pred_fallthru
          _
        // Predicated region
        $region17: #{tpu_custom_call.1} parent=11 // pred_check
          %p141 = pneg %p97
        $region18: #{tpu_custom_call.1} parent=11 // pred_check_branch
          %143 = sbr.rel (%p141) target = $region20
        $region19: #{tpu_custom_call.1} parent=11 // pred_region
          _
        $region20: #{tpu_custom_call.1} parent=11 // pred_fallthru
          _
      $region12: #{tpu_custom_call.1} parent=5 // pred_fallthru
        _
      %p144 = scmp.lt.s32.totalorder %s15, 2
      // Predicated region
      $region21: #{tpu_custom_call.1} parent=5 // pred_check
        %p145 = pneg %p144
      $region22: #{tpu_custom_call.1} parent=5 // pred_check_branch
        %147 = sbr.rel (%p145) target = $region24
      $region23: #{tpu_custom_call.1} parent=5 // pred_region
        // Predicated region
        $region25: #{tpu_custom_call.1} parent=23 // pred_check
          %p148 = pneg %p49
        $region26: #{tpu_custom_call.1} parent=23 // pred_check_branch
          %150 = sbr.rel (%p148) target = $region28
        $region27: #{tpu_custom_call.1} parent=23 // pred_region
          %s151 = sand.u32 %s39, 1
          %s152 = scalar_lea.sflag [#allocation5], %s151
          %s153 = sand.u32 %s39, 1
          %s154 = smul.addr %s153, 192
          %s155 = scalar_lea.vmem [#allocation4], %s154
          %s156 = smul.u32 3, %s23
          %s158 = ssub.s32 3072, 3072
          %159 = vsyncadd %s152, %s158
          %s160 = smul.addr %s22, 24
          %s161 = sadd.s32 %s156, %s160
          %s162 = smul.addr %s161, 128
          %s163 = scalar_lea.hbm %s0, %s162
          %s164 = sshll.u32 %s155, 4
          %s165 = int_to_ptr.vmem [resolvable:$true] %s164
          %170 = dma.hbm_to_vmem [thread:$0]  %s163, 3072, %s165, %s152, 384, 384, 24
        $region28: #{tpu_custom_call.1} parent=23 // pred_fallthru
          _
      $region24: #{tpu_custom_call.1} parent=5 // pred_fallthru
        _
      %p171 = scmp.le.s32.totalorder 1, %s15
      %p172 = scmp.lt.s32.totalorder %s15, 3
      %p173 = pnand %p171, %p172
      %p174 = pneg %p173
      // Predicated region
      $region29: #{tpu_custom_call.1} parent=5 // pred_check
        _
      $region30: #{tpu_custom_call.1} parent=5 // pred_check_branch
        %176 = sbr.rel (%p173) target = $region32
      $region31: #{tpu_custom_call.1} parent=5 // pred_region
        %s177 = ssub.s32 %s15, 1
        %s178 = sand.u32 %s42, 1
        %s179 = scalar_lea.sflag [#allocation5], %s178
        %s180 = sand.u32 %s42, 1
        %s181 = smul.addr %s180, 192
        %s182 = scalar_lea.vmem [#allocation4], %s181
        // Predicated region
        $region33: #{tpu_custom_call.1} parent=31 // pred_check
          %p183 = pneg %p55
        $region34: #{tpu_custom_call.1} parent=31 // pred_check_branch
          %185 = sbr.rel (%p183) target = $region36
        $region35: #{tpu_custom_call.1} parent=31 // pred_region
          %186 = dma.done %s179, 3072
        $region36: #{tpu_custom_call.1} parent=31 // pred_fallthru
          _
        %s187 = sand.u32 %s42, 1
        %s188 = scalar_lea.sflag [#allocation5], %s187
        %s189 = sand.u32 %s42, 1
        %s190 = smul.addr %s189, 192
        %s191 = scalar_lea.vmem [#allocation4], %s190
        %p192 = pneg %p55
        %p193 = pneg %p52
        %p194 = pneg %p76
        %p195 = pneg %p73
        %p196 = pneg %p97
        %p197 = pneg %p94
        %p198 = pneg %p123
        %p199 = pneg %p120
        %s200 = sand.u32 %s110, 1
        %s201 = scalar_lea.sflag [#allocation6], %s200
        %s202 = sand.u32 %s110, 1
        %s203 = scalar_lea.vmem [#allocation7], %s202
        %s204 = smul.u32 3, %s25
        %p205 = scmp.eq.s32.totalorder %s25, 0
        // Predicated region
        $region37: #{tpu_custom_call.1} parent=31 // pred_check
          %p206 = pneg %p205
        $region38: #{tpu_custom_call.1} parent=31 // pred_check_branch
          %208 = sbr.rel (%p206) target = $region40
        $region39: #{tpu_custom_call.1} parent=31 // pred_region
          %209 = vst [vmem:[#allocation2] sm:$0xff] 0.0
          %210 = vst [vmem:[#allocation2 + $0x8] sm:$0xff] 0.0
          %211 = vst [vmem:[#allocation2 + $0x10] sm:$0xff] 0.0
          %212 = vst [vmem:[#allocation2 + $0x18] sm:$0xff] 0.0
          %213 = vst [vmem:[#allocation2 + $0x20] sm:$0xff] 0.0
          %214 = vst [vmem:[#allocation2 + $0x28] sm:$0xff] 0.0
          %215 = vst [vmem:[#allocation2 + $0x30] sm:$0xff] 0.0
          %216 = vst [vmem:[#allocation2 + $0x38] sm:$0xff] 0.0
          %217 = vst [vmem:[#allocation3] sm:$0xff] -inf
          %218 = vst [vmem:[#allocation3 + $0x8] sm:$0xff] -inf
          %219 = vst [vmem:[#allocation3 + $0x10] sm:$0xff] -inf
          %220 = vst [vmem:[#allocation3 + $0x18] sm:$0xff] -inf
          %221 = vst [vmem:[#allocation3 + $0x20] sm:$0xff] -inf
          %222 = vst [vmem:[#allocation3 + $0x28] sm:$0xff] -inf
          %223 = vst [vmem:[#allocation3 + $0x30] sm:$0xff] -inf
          %224 = vst [vmem:[#allocation3 + $0x38] sm:$0xff] -inf
        $region40: #{tpu_custom_call.1} parent=31 // pred_fallthru
          _
        %v225 = vld [vmem:[%s182] sm:$0xff]
        %v226 = vld [vmem:[%s182 + $0x18] sm:$0xff]
        %v227 = vld [vmem:[%s182 + $0x30] sm:$0xff]
        %v228 = vld [vmem:[%s182 + $0x48] sm:$0xff]
        %v229 = vld [vmem:[%s182 + $0x60] sm:$0xff]
        %v230 = vld [vmem:[%s182 + $0x78] sm:$0xff]
        %v231 = vld [vmem:[%s182 + $0x90] sm:$0xff]
        %v232 = vld [vmem:[%s182 + $0xa8] sm:$0xff]
        %v233 = vld [vmem:[#allocation2] sm:$0xff]
        %v234 = vld [vmem:[#allocation2 + $0x8] sm:$0xff]
        %v235 = vld [vmem:[#allocation2 + $0x10] sm:$0xff]
        %v236 = vld [vmem:[#allocation2 + $0x18] sm:$0xff]
        %v237 = vld [vmem:[#allocation2 + $0x20] sm:$0xff]
        %v238 = vld [vmem:[#allocation2 + $0x28] sm:$0xff]
        %v239 = vld [vmem:[#allocation2 + $0x30] sm:$0xff]
        %v240 = vld [vmem:[#allocation2 + $0x38] sm:$0xff]
        %v241 = vadd.f32 %v233, %v225
        %v242 = vadd.f32 %v234, %v226
        %v243 = vadd.f32 %v235, %v227
        %v244 = vadd.f32 %v236, %v228
        %v245 = vadd.f32 %v237, %v229
        %v246 = vadd.f32 %v238, %v230
        %v247 = vadd.f32 %v239, %v231
        %v248 = vadd.f32 %v240, %v232
        %249 = vst [vmem:[#allocation2] sm:$0xff] %v241
        %250 = vst [vmem:[#allocation2 + $0x8] sm:$0xff] %v242
        %251 = vst [vmem:[#allocation2 + $0x10] sm:$0xff] %v243
        %252 = vst [vmem:[#allocation2 + $0x18] sm:$0xff] %v244
        %253 = vst [vmem:[#allocation2 + $0x20] sm:$0xff] %v245
        %254 = vst [vmem:[#allocation2 + $0x28] sm:$0xff] %v246
        %255 = vst [vmem:[#allocation2 + $0x30] sm:$0xff] %v247
        %256 = vst [vmem:[#allocation2 + $0x38] sm:$0xff] %v248
        %v257 = vld [vmem:[#allocation3] sm:$0xff]
        %v258 = vld [vmem:[#allocation3 + $0x8] sm:$0xff]
        %v259 = vld [vmem:[#allocation3 + $0x10] sm:$0xff]
        %v260 = vld [vmem:[#allocation3 + $0x18] sm:$0xff]
        %v261 = vld [vmem:[#allocation3 + $0x20] sm:$0xff]
        %v262 = vld [vmem:[#allocation3 + $0x28] sm:$0xff]
        %v263 = vld [vmem:[#allocation3 + $0x30] sm:$0xff]
        %v264 = vld [vmem:[#allocation3 + $0x38] sm:$0xff]
        %v265 = vmax.f32 %v257, %v225
        %v266 = vmax.f32 %v258, %v226
        %v267 = vmax.f32 %v259, %v227
        %v268 = vmax.f32 %v260, %v228
        %v269 = vmax.f32 %v261, %v229
        %v270 = vmax.f32 %v262, %v230
        %v271 = vmax.f32 %v263, %v231
        %v272 = vmax.f32 %v264, %v232
        %273 = vst [vmem:[#allocation3] sm:$0xff] %v265
        %274 = vst [vmem:[#allocation3 + $0x8] sm:$0xff] %v266
        %275 = vst [vmem:[#allocation3 + $0x10] sm:$0xff] %v267
        %276 = vst [vmem:[#allocation3 + $0x18] sm:$0xff] %v268
        %277 = vst [vmem:[#allocation3 + $0x20] sm:$0xff] %v269
        %278 = vst [vmem:[#allocation3 + $0x28] sm:$0xff] %v270
        %279 = vst [vmem:[#allocation3 + $0x30] sm:$0xff] %v271
        %280 = vst [vmem:[#allocation3 + $0x38] sm:$0xff] %v272
        %v281 = vld [vmem:[%s182 + $0x8] sm:$0xff]
        %v282 = vld [vmem:[%s182 + $0x20] sm:$0xff]
        %v283 = vld [vmem:[%s182 + $0x38] sm:$0xff]
        %v284 = vld [vmem:[%s182 + $0x50] sm:$0xff]
        %v285 = vld [vmem:[%s182 + $0x68] sm:$0xff]
        %v286 = vld [vmem:[%s182 + $0x80] sm:$0xff]
        %v287 = vld [vmem:[%s182 + $0x98] sm:$0xff]
        %v288 = vld [vmem:[%s182 + $0xb0] sm:$0xff]
        %v289 = vld [vmem:[#allocation2] sm:$0xff]
        %v290 = vld [vmem:[#allocation2 + $0x8] sm:$0xff]
        %v291 = vld [vmem:[#allocation2 + $0x10] sm:$0xff]
        %v292 = vld [vmem:[#allocation2 + $0x18] sm:$0xff]
        %v293 = vld [vmem:[#allocation2 + $0x20] sm:$0xff]
        %v294 = vld [vmem:[#allocation2 + $0x28] sm:$0xff]
        %v295 = vld [vmem:[#allocation2 + $0x30] sm:$0xff]
        %v296 = vld [vmem:[#allocation2 + $0x38] sm:$0xff]
        %v297 = vadd.f32 %v289, %v281
        %v298 = vadd.f32 %v290, %v282
        %v299 = vadd.f32 %v291, %v283
        %v300 = vadd.f32 %v292, %v284
        %v301 = vadd.f32 %v293, %v285
        %v302 = vadd.f32 %v294, %v286
        %v303 = vadd.f32 %v295, %v287
        %v304 = vadd.f32 %v296, %v288
        %305 = vst [vmem:[#allocation2] sm:$0xff] %v297
        %306 = vst [vmem:[#allocation2 + $0x8] sm:$0xff] %v298
        %307 = vst [vmem:[#allocation2 + $0x10] sm:$0xff] %v299
        %308 = vst [vmem:[#allocation2 + $0x18] sm:$0xff] %v300
        %309 = vst [vmem:[#allocation2 + $0x20] sm:$0xff] %v301
        %310 = vst [vmem:[#allocation2 + $0x28] sm:$0xff] %v302
        %311 = vst [vmem:[#allocation2 + $0x30] sm:$0xff] %v303
        %312 = vst [vmem:[#allocation2 + $0x38] sm:$0xff] %v304
        %v313 = vld [vmem:[#allocation3] sm:$0xff]
        %v314 = vld [vmem:[#allocation3 + $0x8] sm:$0xff]
        %v315 = vld [vmem:[#allocation3 + $0x10] sm:$0xff]
        %v316 = vld [vmem:[#allocation3 + $0x18] sm:$0xff]
        %v317 = vld [vmem:[#allocation3 + $0x20] sm:$0xff]
        %v318 = vld [vmem:[#allocation3 + $0x28] sm:$0xff]
        %v319 = vld [vmem:[#allocation3 + $0x30] sm:$0xff]
        %v320 = vld [vmem:[#allocation3 + $0x38] sm:$0xff]
        %v321 = vmax.f32 %v313, %v281
        %v322 = vmax.f32 %v314, %v282
        %v323 = vmax.f32 %v315, %v283
        %v324 = vmax.f32 %v316, %v284
        %v325 = vmax.f32 %v317, %v285
        %v326 = vmax.f32 %v318, %v286
        %v327 = vmax.f32 %v319, %v287
        %v328 = vmax.f32 %v320, %v288
        %329 = vst [vmem:[#allocation3] sm:$0xff] %v321
        %330 = vst [vmem:[#allocation3 + $0x8] sm:$0xff] %v322
        %331 = vst [vmem:[#allocation3 + $0x10] sm:$0xff] %v323
        %332 = vst [vmem:[#allocation3 + $0x18] sm:$0xff] %v324
        %333 = vst [vmem:[#allocation3 + $0x20] sm:$0xff] %v325
        %334 = vst [vmem:[#allocation3 + $0x28] sm:$0xff] %v326
        %335 = vst [vmem:[#allocation3 + $0x30] sm:$0xff] %v327
        %336 = vst [vmem:[#allocation3 + $0x38] sm:$0xff] %v328
        %v337 = vld [vmem:[%s182 + $0x10] sm:$0xff]
        %v338 = vld [vmem:[%s182 + $0x28] sm:$0xff]
        %v339 = vld [vmem:[%s182 + $0x40] sm:$0xff]
        %v340 = vld [vmem:[%s182 + $0x58] sm:$0xff]
        %v341 = vld [vmem:[%s182 + $0x70] sm:$0xff]
        %v342 = vld [vmem:[%s182 + $0x88] sm:$0xff]
        %v343 = vld [vmem:[%s182 + $0xa0] sm:$0xff]
        %v344 = vld [vmem:[%s182 + $0xb8] sm:$0xff]
        %v345 = vld [vmem:[#allocation2] sm:$0xff]
        %v346 = vld [vmem:[#allocation2 + $0x8] sm:$0xff]
        %v347 = vld [vmem:[#allocation2 + $0x10] sm:$0xff]
        %v348 = vld [vmem:[#allocation2 + $0x18] sm:$0xff]
        %v349 = vld [vmem:[#allocation2 + $0x20] sm:$0xff]
        %v350 = vld [vmem:[#allocation2 + $0x28] sm:$0xff]
        %v351 = vld [vmem:[#allocation2 + $0x30] sm:$0xff]
        %v352 = vld [vmem:[#allocation2 + $0x38] sm:$0xff]
        %v353 = vadd.f32 %v345, %v337
        %v354 = vadd.f32 %v346, %v338
        %v355 = vadd.f32 %v347, %v339
        %v356 = vadd.f32 %v348, %v340
        %v357 = vadd.f32 %v349, %v341
        %v358 = vadd.f32 %v350, %v342
        %v359 = vadd.f32 %v351, %v343
        %v360 = vadd.f32 %v352, %v344
        %vm361 = vcmask 556032
        %362 = vst.msk [vmem:[#allocation2] sm:$0xff] %vm361, %v353
        %363 = vst.msk [vmem:[#allocation2 + $0x8] sm:$0xff] %vm361, %v354
        %364 = vst.msk [vmem:[#allocation2 + $0x10] sm:$0xff] %vm361, %v355
        %365 = vst.msk [vmem:[#allocation2 + $0x18] sm:$0xff] %vm361, %v356
        %366 = vst.msk [vmem:[#allocation2 + $0x20] sm:$0xff] %vm361, %v357
        %367 = vst.msk [vmem:[#allocation2 + $0x28] sm:$0xff] %vm361, %v358
        %368 = vst.msk [vmem:[#allocation2 + $0x30] sm:$0xff] %vm361, %v359
        %369 = vst.msk [vmem:[#allocation2 + $0x38] sm:$0xff] %vm361, %v360
        %v370 = vld [vmem:[#allocation3] sm:$0xff]
        %v371 = vld [vmem:[#allocation3 + $0x8] sm:$0xff]
        %v372 = vld [vmem:[#allocation3 + $0x10] sm:$0xff]
        %v373 = vld [vmem:[#allocation3 + $0x18] sm:$0xff]
        %v374 = vld [vmem:[#allocation3 + $0x20] sm:$0xff]
        %v375 = vld [vmem:[#allocation3 + $0x28] sm:$0xff]
        %v376 = vld [vmem:[#allocation3 + $0x30] sm:$0xff]
        %v377 = vld [vmem:[#allocation3 + $0x38] sm:$0xff]
        %v378 = vmax.f32 %v370, %v337
        %v379 = vmax.f32 %v371, %v338
        %v380 = vmax.f32 %v372, %v339
        %v381 = vmax.f32 %v373, %v340
        %v382 = vmax.f32 %v374, %v341
        %v383 = vmax.f32 %v375, %v342
        %v384 = vmax.f32 %v376, %v343
        %v385 = vmax.f32 %v377, %v344
        %386 = vst.msk [vmem:[#allocation3] sm:$0xff] %vm361, %v378
        %387 = vst.msk [vmem:[#allocation3 + $0x8] sm:$0xff] %vm361, %v379
        %388 = vst.msk [vmem:[#allocation3 + $0x10] sm:$0xff] %vm361, %v380
        %389 = vst.msk [vmem:[#allocation3 + $0x18] sm:$0xff] %vm361, %v381
        %390 = vst.msk [vmem:[#allocation3 + $0x20] sm:$0xff] %vm361, %v382
        %391 = vst.msk [vmem:[#allocation3 + $0x28] sm:$0xff] %vm361, %v383
        %392 = vst.msk [vmem:[#allocation3 + $0x30] sm:$0xff] %vm361, %v384
        %393 = vst.msk [vmem:[#allocation3 + $0x38] sm:$0xff] %vm361, %v385
        // Predicated region
        $region41: #{tpu_custom_call.1} parent=31 // pred_check
          %p394 = pneg %p205
        $region42: #{tpu_custom_call.1} parent=31 // pred_check_branch
          %396 = sbr.rel (%p394) target = $region44
        $region43: #{tpu_custom_call.1} parent=31 // pred_region
          %v397 = vld [vmem:[#allocation2] sm:$0xff]
          %v398 = vld [vmem:[#allocation2 + $0x8] sm:$0xff]
          %v399 = vld [vmem:[#allocation2 + $0x10] sm:$0xff]
          %v400 = vld [vmem:[#allocation2 + $0x18] sm:$0xff]
          %v401 = vld [vmem:[#allocation2 + $0x20] sm:$0xff]
          %v402 = vld [vmem:[#allocation2 + $0x28] sm:$0xff]
          %v403 = vld [vmem:[#allocation2 + $0x30] sm:$0xff]
          %v404 = vld [vmem:[#allocation2 + $0x38] sm:$0xff]
          %405 = vadd.xlane.f32.xlu0 %v397
          %v406 = vpop.xlane.xlu0 %405
          %407 = vadd.xlane.f32.xlu0 %v398
          %v408 = vpop.xlane.xlu0 %407
          %409 = vadd.xlane.f32.xlu0 %v399
          %v410 = vpop.xlane.xlu0 %409
          %411 = vadd.xlane.f32.xlu0 %v400
          %v412 = vpop.xlane.xlu0 %411
          %413 = vadd.xlane.f32.xlu0 %v401
          %v414 = vpop.xlane.xlu0 %413
          %415 = vadd.xlane.f32.xlu0 %v402
          %v416 = vpop.xlane.xlu0 %415
          %417 = vadd.xlane.f32.xlu0 %v403
          %v418 = vpop.xlane.xlu0 %417
          %419 = vadd.xlane.f32.xlu0 %v404
          %v420 = vpop.xlane.xlu0 %419
          %v421 = vld [vmem:[#allocation3] sm:$0xff]
          %v422 = vld [vmem:[#allocation3 + $0x8] sm:$0xff]
          %v423 = vld [vmem:[#allocation3 + $0x10] sm:$0xff]
          %v424 = vld [vmem:[#allocation3 + $0x18] sm:$0xff]
          %v425 = vld [vmem:[#allocation3 + $0x20] sm:$0xff]
          %v426 = vld [vmem:[#allocation3 + $0x28] sm:$0xff]
          %v427 = vld [vmem:[#allocation3 + $0x30] sm:$0xff]
          %v428 = vld [vmem:[#allocation3 + $0x38] sm:$0xff]
          %429 = vmax.xlane.f32.xlu0 %v421
          %v430 = vpop.xlane.xlu0 %429
          %431 = vmax.xlane.f32.xlu0 %v422
          %v432 = vpop.xlane.xlu0 %431
          %433 = vmax.xlane.f32.xlu0 %v423
          %v434 = vpop.xlane.xlu0 %433
          %435 = vmax.xlane.f32.xlu0 %v424
          %v436 = vpop.xlane.xlu0 %435
          %437 = vmax.xlane.f32.xlu0 %v425
          %v438 = vpop.xlane.xlu0 %437
          %439 = vmax.xlane.f32.xlu0 %v426
          %v440 = vpop.xlane.xlu0 %439
          %441 = vmax.xlane.f32.xlu0 %v427
          %v442 = vpop.xlane.xlu0 %441
          %443 = vmax.xlane.f32.xlu0 %v428
          %v444 = vpop.xlane.xlu0 %443
          %v445 = vmul.f32 %v406, 0.0030864198
          %v446 = vmul.f32 %v408, 0.0030864198
          %v447 = vmul.f32 %v410, 0.0030864198
          %v448 = vmul.f32 %v412, 0.0030864198
          %v449 = vmul.f32 %v414, 0.0030864198
          %v450 = vmul.f32 %v416, 0.0030864198
          %v451 = vmul.f32 %v418, 0.0030864198
          %v452 = vmul.f32 %v420, 0.0030864198
          %v461 = vlaneseq
          %v462 = vand.u32 %v461, 127
          %v463 = vlaneseq
          %v464 = vshrl.u32 %v463, 7
          %v465 = vsub.s32 %v462, %v464
          %v466 = vrot.slane %v445, %v465
          %v467 = vadd.s32 %v462, 4294967288
          %v468 = vlaneseq
          %v469 = vshrl.u32 %v468, 7
          %v470 = vsub.s32 %v467, %v469
          %v471 = vrot.slane %v446, %v470
          %vm472 = vcmask 130112
          %v473 = vsel %vm472, %v471, %v466
          %v474 = vadd.s32 %v462, 4294967280
          %v475 = vlaneseq
          %v476 = vshrl.u32 %v475, 7
          %v477 = vsub.s32 %v474, %v476
          %v478 = vrot.slane %v447, %v477
          %vm479 = vcmask 195712
          %v480 = vsel %vm479, %v478, %v473
          %v481 = vadd.s32 %v462, 4294967272
          %v482 = vlaneseq
          %v483 = vshrl.u32 %v482, 7
          %v484 = vsub.s32 %v481, %v483
          %v485 = vrot.slane %v448, %v484
          %vm486 = vcmask 261312
          %v487 = vsel %vm486, %v485, %v480
          %v488 = vadd.s32 %v462, 4294967264
          %v489 = vlaneseq
          %v490 = vshrl.u32 %v489, 7
          %v491 = vsub.s32 %v488, %v490
          %v492 = vrot.slane %v449, %v491
          %vm493 = vcmask 326912
          %v494 = vsel %vm493, %v492, %v487
          %v495 = vadd.s32 %v462, 4294967256
          %v496 = vlaneseq
          %v497 = vshrl.u32 %v496, 7
          %v498 = vsub.s32 %v495, %v497
          %v499 = vrot.slane %v450, %v498
          %vm500 = vcmask 392512
          %v501 = vsel %vm500, %v499, %v494
          %v502 = vadd.s32 %v462, 4294967248
          %v503 = vlaneseq
          %v504 = vshrl.u32 %v503, 7
          %v505 = vsub.s32 %v502, %v504
          %v506 = vrot.slane %v451, %v505
          %vm507 = vcmask 458112
          %v508 = vsel %vm507, %v506, %v501
          %v509 = vadd.s32 %v462, 4294967240
          %v510 = vlaneseq
          %v511 = vshrl.u32 %v510, 7
          %v512 = vsub.s32 %v509, %v511
          %v513 = vrot.slane %v452, %v512
          %vm514 = vcmask 523712
          %v515 = vsel %vm514, %v513, %v508
          %v525 = vlaneseq
          %v526 = vshrl.u32 %v525, 7
          %v527 = vsub.s32 %v462, %v526
          %v528 = vrot.slane %v430, %v527
          %v529 = vlaneseq
          %v530 = vshrl.u32 %v529, 7
          %v531 = vsub.s32 %v467, %v530
          %v532 = vrot.slane %v432, %v531
          %v533 = vsel %vm472, %v532, %v528
          %v534 = vlaneseq
          %v535 = vshrl.u32 %v534, 7
          %v536 = vsub.s32 %v474, %v535
          %v537 = vrot.slane %v434, %v536
          %v538 = vsel %vm479, %v537, %v533
          %v539 = vlaneseq
          %v540 = vshrl.u32 %v539, 7
          %v541 = vsub.s32 %v481, %v540
          %v542 = vrot.slane %v436, %v541
          %v543 = vsel %vm486, %v542, %v538
          %v544 = vlaneseq
          %v545 = vshrl.u32 %v544, 7
          %v546 = vsub.s32 %v488, %v545
          %v547 = vrot.slane %v438, %v546
          %v548 = vsel %vm493, %v547, %v543
          %v549 = vlaneseq
          %v550 = vshrl.u32 %v549, 7
          %v551 = vsub.s32 %v495, %v550
          %v552 = vrot.slane %v440, %v551
          %v553 = vsel %vm500, %v552, %v548
          %v554 = vlaneseq
          %v555 = vshrl.u32 %v554, 7
          %v556 = vsub.s32 %v502, %v555
          %v557 = vrot.slane %v442, %v556
          %v558 = vsel %vm507, %v557, %v553
          %v559 = vlaneseq
          %v560 = vshrl.u32 %v559, 7
          %v561 = vsub.s32 %v509, %v560
          %v562 = vrot.slane %v444, %v561
          %v563 = vsel %vm514, %v562, %v558
          %vm565 = vcmask 1040384
          %v566 = vsel %vm565, %v515, %v563
          %v567 = vld [vmem:[%s1] sm:$0xff]
          %v568 = vld [vmem:[%s1 + $0x8] sm:$0xff]
          %v569 = vld [vmem:[%s1 + $0x10] sm:$0xff]
          %v570 = vld [vmem:[%s1 + $0x18] sm:$0xff]
          %v571 = vld [vmem:[%s1 + $0x20] sm:$0xff]
          %v572 = vld [vmem:[%s1 + $0x28] sm:$0xff]
          %v573 = vld [vmem:[%s1 + $0x30] sm:$0xff]
          %v574 = vld [vmem:[%s1 + $0x38] sm:$0xff]
          %vm575 = vcmask 523264
          %v577 = vsel %vm575, %v566, 0
          %579 = vmatprep.subr.mxu0 0.0
          %580 = vmatpush1.msra.mxu0 %v567
          %581 = vmatprep.subr.mxu0 0.0
          %582 = vmatpush1.msra.mxu0 %v568
          %583 = vmatprep.subr.mxu0 0.0
          %584 = vmatpush1.msra.mxu0 %v569
          %585 = vmatprep.subr.mxu0 0.0
          %586 = vmatpush1.msra.mxu0 %v570
          %587 = vmatprep.subr.mxu0 0.0
          %588 = vmatpush1.msra.mxu0 %v571
          %589 = vmatprep.subr.mxu0 0.0
          %590 = vmatpush1.msra.mxu0 %v572
          %591 = vmatprep.subr.mxu0 0.0
          %592 = vmatpush1.msra.mxu0 %v573
          %593 = vmatprep.subr.mxu0 0.0
          %594 = vmatpush1.msra.mxu0 %v574
          %595 = vmatprep.subr.mxu0 0.0
          %596 = vmatpush1.msra.mxu0 0.0
          %597 = vmatprep.subr.mxu0 0.0
          %598 = vmatpush1.msra.mxu0 0.0
          %599 = vmatprep.subr.mxu0 0.0
          %600 = vmatpush1.msra.mxu0 0.0
          %601 = vmatprep.subr.mxu0 0.0
          %602 = vmatpush1.msra.mxu0 0.0
          %603 = vmatprep.subr.mxu0 0.0
          %604 = vmatpush1.msra.mxu0 0.0
          %605 = vmatprep.subr.mxu0 0.0
          %606 = vmatpush1.msra.mxu0 0.0
          %607 = vmatprep.subr.mxu0 0.0
          %608 = vmatpush1.msra.mxu0 0.0
          %609 = vmatprep.subr.mxu0 0.0
          %610 = vmatpush1.msra.mxu0 0.0
          %611 = vmatprep.subr.mxu0 0.0
          %612 = vmatpush1.msra.mxu0 0.0
          %613 = vmatprep.subr.mxu0 0.0
          %614 = vmatpush1.msra.mxu0 0.0
          %615 = vmatprep.subr.mxu0 0.0
          %616 = vmatpush1.msra.mxu0 0.0
          %617 = vmatprep.subr.mxu0 0.0
          %618 = vmatpush1.msra.mxu0 0.0
          %619 = vmatprep.subr.mxu0 0.0
          %620 = vmatpush1.msra.mxu0 0.0
          %621 = vmatprep.subr.mxu0 0.0
          %622 = vmatpush1.msra.mxu0 0.0
          %623 = vmatprep.subr.mxu0 0.0
          %624 = vmatpush1.msra.mxu0 0.0
          %625 = vmatprep.subr.mxu0 0.0
          %626 = vmatpush1.msra.mxu0 0.0
          %627 = vmatprep.subr.mxu0 0.0
          %628 = vmatpush1.msra.mxu0 0.0
          %629 = vmatprep.subr.mxu0 0.0
          %630 = vmatpush1.msra.mxu0 0.0
          %631 = vmatprep.subr.mxu0 0.0
          %632 = vmatpush1.msra.mxu0 0.0
          %633 = vmatprep.subr.mxu0 0.0
          %634 = vmatpush1.msra.mxu0 0.0
          %635 = vmatprep.subr.mxu0 0.0
          %636 = vmatpush1.msra.mxu0 0.0
          %637 = vmatprep.subr.mxu0 0.0
          %638 = vmatpush1.msra.mxu0 0.0
          %639 = vmatprep.subr.mxu0 0.0
          %640 = vmatpush1.msra.mxu0 0.0
          %641 = vmatprep.subr.mxu0 0.0
          %642 = vmatpush1.msra.mxu0 0.0
          %643 = vmatprep.mubr.f32.mxu0 0.0
          %644 = vmatmul.mubr.f32.gmra.mrb[0].mxu0 %v577
          %v645 = vpop.f32.mrb[0].mxu0
          %v646 = vadd.f32 0.0, %v645
          %v647 = vpop.f32.mrb[0].mxu0
          %648 = vdwg.mxu0
          %v649 = vmax.f32 %v646, 0.0
          %v650 = vld [vmem:[%s2] sm:$0xf]
          %vm651 = vcmask 31744
          %v653 = vsel %vm651, %v649, 0
          %vm655 = vcmask 1043456
          %v657 = vsel %vm655, %v650, 0
          %659 = vmatprep.subr.mxu0 0.0
          %660 = vmatpush1.msra.mxu0 %v657
          %661 = vmatprep.subr.mxu0 0.0
          %662 = vmatpush1.msra.mxu0 0.0
          %663 = vmatprep.subr.mxu0 0.0
          %664 = vmatpush1.msra.mxu0 0.0
          %665 = vmatprep.subr.mxu0 0.0
          %666 = vmatpush1.msra.mxu0 0.0
          %667 = vmatprep.subr.mxu0 0.0
          %668 = vmatpush1.msra.mxu0 0.0
          %669 = vmatprep.subr.mxu0 0.0
          %670 = vmatpush1.msra.mxu0 0.0
          %671 = vmatprep.subr.mxu0 0.0
          %672 = vmatpush1.msra.mxu0 0.0
          %673 = vmatprep.subr.mxu0 0.0
          %674 = vmatpush1.msra.mxu0 0.0
          %675 = vmatprep.subr.mxu0 0.0
          %676 = vmatpush1.msra.mxu0 0.0
          %677 = vmatprep.subr.mxu0 0.0
          %678 = vmatpush1.msra.mxu0 0.0
          %679 = vmatprep.subr.mxu0 0.0
          %680 = vmatpush1.msra.mxu0 0.0
          %681 = vmatprep.subr.mxu0 0.0
          %682 = vmatpush1.msra.mxu0 0.0
          %683 = vmatprep.subr.mxu0 0.0
          %684 = vmatpush1.msra.mxu0 0.0
          %685 = vmatprep.subr.mxu0 0.0
          %686 = vmatpush1.msra.mxu0 0.0
          %687 = vmatprep.subr.mxu0 0.0
          %688 = vmatpush1.msra.mxu0 0.0
          %689 = vmatprep.subr.mxu0 0.0
          %690 = vmatpush1.msra.mxu0 0.0
          %691 = vmatprep.subr.mxu0 0.0
          %692 = vmatpush1.msra.mxu0 0.0
          %693 = vmatprep.subr.mxu0 0.0
          %694 = vmatpush1.msra.mxu0 0.0
          %695 = vmatprep.subr.mxu0 0.0
          %696 = vmatpush1.msra.mxu0 0.0
          %697 = vmatprep.subr.mxu0 0.0
          %698 = vmatpush1.msra.mxu0 0.0
          %699 = vmatprep.subr.mxu0 0.0
          %700 = vmatpush1.msra.mxu0 0.0
          %701 = vmatprep.subr.mxu0 0.0
          %702 = vmatpush1.msra.mxu0 0.0
          %703 = vmatprep.subr.mxu0 0.0
          %704 = vmatpush1.msra.mxu0 0.0
          %705 = vmatprep.subr.mxu0 0.0
          %706 = vmatpush1.msra.mxu0 0.0
          %707 = vmatprep.subr.mxu0 0.0
          %708 = vmatpush1.msra.mxu0 0.0
          %709 = vmatprep.subr.mxu0 0.0
          %710 = vmatpush1.msra.mxu0 0.0
          %711 = vmatprep.subr.mxu0 0.0
          %712 = vmatpush1.msra.mxu0 0.0
          %713 = vmatprep.subr.mxu0 0.0
          %714 = vmatpush1.msra.mxu0 0.0
          %715 = vmatprep.subr.mxu0 0.0
          %716 = vmatpush1.msra.mxu0 0.0
          %717 = vmatprep.subr.mxu0 0.0
          %718 = vmatpush1.msra.mxu0 0.0
          %719 = vmatprep.subr.mxu0 0.0
          %720 = vmatpush1.msra.mxu0 0.0
          %721 = vmatprep.subr.mxu0 0.0
          %722 = vmatpush1.msra.mxu0 0.0
          %723 = vmatprep.mubr.f32.mxu0 0.0
          %724 = vmatmul.mubr.f32.gmra.mrb[0].mxu0 %v653
          %v725 = vpop.f32.mrb[0].mxu0
          %v726 = vadd.f32 0.0, %v725
          %v727 = vpop.f32.mrb[0].mxu0
          %728 = vdwg.mxu0
          %v730 = vrot.slane %v726, 1
          %v732 = vadd.f32 %v726, %v730
          %v733 = vxor.u32 %v732, 2147483648
          %v734 = vmul.f32 %v733, 1.442695
          %v735 = vpow.pop %v734
          %v736 = vadd.f32 %v735, 1.0
          %v737 = vrcp.pop %v736
          %v738 = vmul.f32 1.0, %v737
          %vm739 = vcmask 516096
          %740 = vst.msk [vmem:[%s203] sm:$0x1] %vm739, %v738
        $region44: #{tpu_custom_call.1} parent=31 // pred_fallthru
          _
        %s741 = sand.u32 %s110, 1
        %s742 = scalar_lea.sflag [#allocation6], %s741
        %s743 = sand.u32 %s110, 1
        %s744 = scalar_lea.vmem [#allocation7], %s743
        // Predicated region
        $region45: #{tpu_custom_call.1} parent=31 // pred_check
          %p745 = pneg %p120
        $region46: #{tpu_custom_call.1} parent=31 // pred_check_branch
          %747 = sbr.rel (%p745) target = $region48
        $region47: #{tpu_custom_call.1} parent=31 // pred_region
          %s749 = ssub.s32 16, 16
          %750 = vsyncadd %s742, %s749
          %s751 = smul.addr %s24, 16
          %s752 = scalar_lea.hbm %s3, %s751
          %s754 = sshll.u32 %s744, 4
          %s755 = int_to_ptr.vmem [resolvable:$true] %s754
          %757 = dma.vmem_to_hbm [thread:$0]  %s755, 16, %s752, %s742
        $region48: #{tpu_custom_call.1} parent=31 // pred_fallthru
          _
      $region32: #{tpu_custom_call.1} parent=5 // pred_fallthru
        _
      %p758 = scmp.le.s32.totalorder 2, %s15
      // Predicated region
      $region49: #{tpu_custom_call.1} parent=5 // pred_check
        %p759 = pneg %p758
      $region50: #{tpu_custom_call.1} parent=5 // pred_check_branch
        %761 = sbr.rel (%p759) target = $region52
      $region51: #{tpu_custom_call.1} parent=5 // pred_region
        %s762 = ssub.s32 %s15, 2
        // Predicated region
        $region53: #{tpu_custom_call.1} parent=51 // pred_check
          %p763 = pneg %p126
        $region54: #{tpu_custom_call.1} parent=51 // pred_check_branch
          %765 = sbr.rel (%p763) target = $region56
        $region55: #{tpu_custom_call.1} parent=51 // pred_region
          %s766 = sand.u32 %s111, 1
          %s767 = scalar_lea.sflag [#allocation6], %s766
          %s768 = sand.u32 %s111, 1
          %s769 = scalar_lea.vmem [#allocation7], %s768
          %770 = dma.done %s767, 16
        $region56: #{tpu_custom_call.1} parent=51 // pred_fallthru
          _
      $region52: #{tpu_custom_call.1} parent=5 // pred_fallthru
        _
    $region6: #{tpu_custom_call.1} parent=1 // loop_footer
      %s19 = sadd.s32 1, %s15
    $region7: #{tpu_custom_call.1} parent=1 // loop_footer_branch
      %14 = sbr.rel target = $region3
    $region8: #{tpu_custom_call.1} parent=1 // loop_exit
      _
    %771 = vsyncpa [#allocation5], 1
    %s772 = scalar_lea.sflag [#allocation5], 1
    %773 = vsyncpa %s772, 1
    %774 = vsyncpa [#allocation6], 1
    %s775 = scalar_lea.sflag [#allocation6], 1
    %776 = vsyncpa %s775, 1

</llo_original>
